<compile_context>
chip_gen: v6e
topology: v6e:2x2x1
jax: 0.10.0
libtpu: 0.0.40
codegen_flags: <defaults>
</compile_context>

<pallas_src>
import math

import jax
import jax.numpy as jnp
import numpy as np
from jax.experimental import pallas as pl
from jax.experimental.pallas import tpu as pltpu


def _round_up(a, m):
    return -(-a // m) * m


def _make_kernel(num_common, apply_act_head, bm, w_out, p_out):
    """Pallas kernel body for a fixed (static) fused layer structure.

    Ref order: x, [w_common_i, b_common_i]*num_common,
               [w_head_j, b_head_j]*n_head (heads fused over objectives),
               out  -- out block is (bm//p_out, p_out*w_out), lane-dense.
    """
    n_head = len(apply_act_head)
    rows_g = bm // p_out

    def kernel(*refs):
        x_ref = refs[0]
        common_refs = refs[1:1 + 2 * num_common]
        head_refs = refs[1 + 2 * num_common:1 + 2 * num_common + 2 * n_head]
        out_ref = refs[-1]

        h = x_ref[...]
        # Common layers: Linear(input_dim, input_dim) + ReLU, computed ONCE.
        for i in range(num_common):
            w = common_refs[2 * i][...]
            b = common_refs[2 * i + 1][...]
            h = jnp.maximum(
                jnp.dot(h, w, preferred_element_type=jnp.float32) + b, 0.0)

        # Fused head layers (all objectives in one matmul per layer).
        for j in range(n_head):
            w = head_refs[2 * j][...]
            b = head_refs[2 * j + 1][...]
            h = jnp.dot(h, w, preferred_element_type=jnp.float32) + b
            if apply_act_head[j]:
                h = jnp.maximum(h, 0.0)

        h = h.astype(out_ref.dtype)
        if p_out > 1:
            # Lane-dense pack: fold p_out contiguous row-groups into the lane
            # axis.  Sublane slices are vreg-aligned (rows_g % 8 == 0); the
            # lane concat is a cheap relayout on otherwise-idle units, and the
            # store becomes a single unmasked 128-lane vst per vreg.
            h = jnp.concatenate(
                [h[r * rows_g:(r + 1) * rows_g, :] for r in range(p_out)],
                axis=-1)
        out_ref[...] = h

    return kernel


def mlp_multi_objective_forward(x, common_params, head_params, objectives,
                                num_common_lyr, layer_channels,
                                block_rows=2048):
    """Forward pass of MLP_multi_objective.

    common_params: list of (W (D_in, D_in), b (1, D_in)) -- one per common layer
    head_params:   list of (W (n_obj, c_j, c_{j+1}), b (n_obj, 1, c_{j+1}))
                   -- one per head layer, stacked over objectives
    Returns a dict {objective: (B, output_dim)} like the PyTorch module.
    """
    B, D_in = x.shape
    n_obj = len(objectives)
    n_head = len(layer_channels) - 1
    D_out = layer_channels[-1]
    W_out = n_obj * D_out

    # Exactly reproduce the PyTorch condition: the head layer gets NO activation
    # iff layer_ind + num_common_lyr == len(layer_channels) - 1, else ReLU.
    apply_act = [
        (j + num_common_lyr) != (len(layer_channels) - 1) for j in range(n_head)
    ]

    # --- Fuse the per-objective heads into lane-dense weights (one-time XLA
    #     op).  Head layer 0 consumes the shared common output -> concatenate
    #     along the output axis.  Deeper head layers have per-objective inputs
    #     -> block-diagonal over objectives (exact for finite values).
    fused_heads = []
    for j, (w, b) in enumerate(head_params):
        b_cat = jnp.concatenate([b[o] for o in range(n_obj)], axis=-1)
        if j == 0:
            w_f = jnp.concatenate([w[o] for o in range(n_obj)], axis=-1)
        else:
            w_f = jax.scipy.linalg.block_diag(*[w[o] for o in range(n_obj)])
        fused_heads.append((w_f, b_cat))

    # --- Output lane-packing factor: fold rows into lanes so stores are
    #     128-lane dense (biggest single lever on all generations, esp. v5e).
    p_out = 128 // W_out if (W_out < 128 and 128 % W_out == 0) else 1

    # --- Batch tiling: weights resident, only x/out stream through the grid.
    mult = 8 * p_out                       # keeps the packed block (8,128)-aligned
    block_rows = _round_up(max(block_rows, mult), mult)
    B_ceil = _round_up(B, mult)
    if B_ceil > block_rows:
        bm = block_rows
    elif B_ceil >= 2 * mult:
        # Small batch: split into >=2 grid steps so both v7x TensorCores get
        # a tile (no effect on single-TC v5e/v6e).
        bm = _round_up(-(-B_ceil // 2), mult)
    else:
        bm = B_ceil
    B_pad = _round_up(B, bm)
    grid = B_pad // bm
    if B_pad != B:
        x = jnp.pad(x, ((0, B_pad - B), (0, 0)))

    if p_out > 1:
        out_shape_padded = (B_pad // p_out, p_out * W_out)
        out_block = (bm // p_out, p_out * W_out)
    else:
        out_shape_padded = (B_pad, W_out)
        out_block = (bm, W_out)

    inputs = [x]
    in_specs = [pl.BlockSpec((bm, D_in), lambda i: (i, 0))]
    for (w, b) in list(common_params) + fused_heads:
        inputs += [w, b]
        in_specs += [
            pl.BlockSpec(w.shape, lambda i: (0, 0)),
            pl.BlockSpec(b.shape, lambda i: (0, 0)),
        ]

    # Advisory cost estimate so XLA schedules the tiny custom call tightly.
    itemsize = x.dtype.itemsize
    flops = 0
    for (w, _) in list(common_params) + fused_heads:
        flops += 2 * B_pad * w.shape[0] * w.shape[1]
    bytes_accessed = sum(int(a.size) * a.dtype.itemsize for a in inputs)
    bytes_accessed += B_pad * W_out * itemsize
    cost = pl.CostEstimate(flops=int(flops), transcendentals=0,
                           bytes_accessed=int(bytes_accessed))

    kernel = _make_kernel(num_common_lyr, apply_act, bm, W_out, p_out)

    out = pl.pallas_call(
        kernel,
        out_shape=jax.ShapeDtypeStruct(out_shape_padded, x.dtype),
        grid_spec=pltpu.PrefetchScalarGridSpec(
            num_scalar_prefetch=0,
            grid=(grid,),
            in_specs=in_specs,
            out_specs=pl.BlockSpec(out_block, lambda i: (i, 0)),
        ),
        compiler_params=pltpu.CompilerParams(
            dimension_semantics=("parallel",)),
        cost_estimate=cost,
    )(*inputs)

    # Unpack the lane-folded output back to (B, W_out) -- layout plumbing only.
    if p_out > 1:
        out = out.reshape(grid, bm // p_out, p_out, W_out)
        out = jnp.transpose(out, (0, 2, 1, 3)).reshape(B_pad, W_out)
    out = out[:B]
    return {
        obj: out[:, o * D_out:(o + 1) * D_out]
        for o, obj in enumerate(objectives)
    }


def _reference_forward(x, common_params, head_params, objectives,
                       num_common_lyr, layer_channels):
    """Pure-JAX reference mirroring the PyTorch forward exactly."""
    h = x
    for (w, b) in common_params:
        h = jnp.maximum(h @ w + b, 0.0)
    out = {}
    for oi, obj in enumerate(objectives):
        y = h
        for j, (w, b) in enumerate(head_params):
            y = y @ w[oi] + b[oi]
            if (j + num_common_lyr) != (len(layer_channels) - 1):
                y = jnp.maximum(y, 0.0)
        out[obj] = y
    return out


def _xavier_normal(key, fan_in, fan_out, gain):
    std = gain * math.sqrt(2.0 / (fan_in + fan_out))
    return std * jax.random.normal(key, (fan_in, fan_out), dtype=jnp.float32)


def _linear_bias(key, fan_in, fan_out):
    bound = 1.0 / math.sqrt(fan_in)
    return jax.random.uniform(key, (1, fan_out), dtype=jnp.float32,
                              minval=-bound, maxval=bound)


if __name__ == "__main__":
    # Module configuration (small shapes)
    input_dim = 32
    hidden_channels = [32]
    output_dim = 16
    num_common_lyr = 1
    objectives = ("perf", "area")
    layer_channels = [input_dim] + hidden_channels + [output_dim]

    gain = math.sqrt(2.0)  # nn.init.calculate_gain('relu')
    key = jax.random.PRNGKey(0)

    # Common layers: Linear(input_dim, input_dim)
    common_params = []
    for _ in range(num_common_lyr):
        key, wk, bk = jax.random.split(key, 3)
        common_params.append((
            _xavier_normal(wk, input_dim, input_dim, gain),
            _linear_bias(bk, input_dim, input_dim),
        ))

    # Head layers: stacked over objectives, shapes follow layer_channels
    head_params = []
    for j in range(len(layer_channels) - 1):
        c_in, c_out = layer_channels[j], layer_channels[j + 1]
        ws, bs = [], []
        for _ in objectives:
            key, wk, bk = jax.random.split(key, 3)
            ws.append(_xavier_normal(wk, c_in, c_out, gain))
            bs.append(_linear_bias(bk, c_in, c_out))
        head_params.append((jnp.stack(ws, axis=0), jnp.stack(bs, axis=0)))

    # Two batch sizes: tiny (single tile) and one that exercises grid>1 + padding.
    for batch in (8, 200):
        key, xk = jax.random.split(key)
        x = jax.random.normal(xk, (batch, input_dim), dtype=jnp.float32)

        out = mlp_multi_objective_forward(x, common_params, head_params,
                                          objectives, num_common_lyr,
                                          layer_channels)
        jax.block_until_ready(out)

        ref = _reference_forward(x, common_params, head_params, objectives,
                                 num_common_lyr, layer_channels)
        for obj in objectives:
            np.testing.assert_allclose(np.asarray(out[obj]),
                                       np.asarray(ref[obj]),
                                       rtol=1e-5, atol=1e-5)

    print("KERNEL_OK")
</pallas_src>

<mosaic_0001>
module attributes {stable_mosaic.version = 11 : i64} {
  func.func @kernel(%arg0: i32, %arg1: memref<32x32xf32, #tpu.memory_space<vmem>>, %arg2: memref<32x32xf32, #tpu.memory_space<vmem>>, %arg3: memref<1x32xf32, #tpu.memory_space<vmem>>, %arg4: memref<32x64xf32, #tpu.memory_space<vmem>>, %arg5: memref<1x64xf32, #tpu.memory_space<vmem>>, %arg6: memref<64x32xf32, #tpu.memory_space<vmem>>, %arg7: memref<1x32xf32, #tpu.memory_space<vmem>>, %arg8: memref<8x128xf32, #tpu.memory_space<vmem>>) attributes {dimension_semantics = [#tpu.dimension_semantics<parallel>], iteration_bounds = array<i64: 1>, scalar_prefetch = 0 : i64, scratch_operands = 0 : i64, tpu.core_type = #tpu.core_type<tc>, window_params = [{transform_indices = @transform_0, window_bounds = array<i64: 32, 32>}, {pipeline_mode = #tpu.pipeline_mode<synchronous>, transform_indices = @transform_1, window_bounds = array<i64: 32, 32>}, {pipeline_mode = #tpu.pipeline_mode<synchronous>, transform_indices = @transform_2, window_bounds = array<i64: 1, 32>}, {pipeline_mode = #tpu.pipeline_mode<synchronous>, transform_indices = @transform_3, window_bounds = array<i64: 32, 64>}, {pipeline_mode = #tpu.pipeline_mode<synchronous>, transform_indices = @transform_4, window_bounds = array<i64: 1, 64>}, {pipeline_mode = #tpu.pipeline_mode<synchronous>, transform_indices = @transform_5, window_bounds = array<i64: 64, 32>}, {pipeline_mode = #tpu.pipeline_mode<synchronous>, transform_indices = @transform_6, window_bounds = array<i64: 1, 32>}, {transform_indices = @transform_7, window_bounds = array<i64: 8, 128>}]} {
    %c0 = arith.constant 0 : index
    %c0_0 = arith.constant 0 : index
    %0 = vector.load %arg1[%c0, %c0_0] : memref<32x32xf32, #tpu.memory_space<vmem>>, vector<32x32xf32>
    %c0_1 = arith.constant 0 : index
    %c0_2 = arith.constant 0 : index
    %1 = vector.load %arg2[%c0_1, %c0_2] : memref<32x32xf32, #tpu.memory_space<vmem>>, vector<32x32xf32>
    %c0_3 = arith.constant 0 : index
    %c0_4 = arith.constant 0 : index
    %2 = vector.load %arg3[%c0_3, %c0_4] : memref<1x32xf32, #tpu.memory_space<vmem>>, vector<1x32xf32>
    %cst = arith.constant dense<0.000000e+00> : vector<32x32xf32>
    %3 = tpu.matmul %0, %1, %cst {dimension_numbers = #tpu.dot_dimension_numbers<[1], [0], [0], [1], [0, 0, 1, 1], [], []>} : vector<32x32xf32>, vector<32x32xf32>, vector<32x32xf32> -> vector<32x32xf32>
    %4 = vector.broadcast %2 : vector<1x32xf32> to vector<32x32xf32>
    %5 = arith.addf %3, %4 : vector<32x32xf32>
    %cst_5 = arith.constant 0.000000e+00 : f32
    %6 = vector.broadcast %cst_5 : f32 to vector<32x32xf32>
    %7 = arith.maximumf %5, %6 : vector<32x32xf32>
    %c0_6 = arith.constant 0 : index
    %c0_7 = arith.constant 0 : index
    %8 = vector.load %arg4[%c0_6, %c0_7] : memref<32x64xf32, #tpu.memory_space<vmem>>, vector<32x64xf32>
    %c0_8 = arith.constant 0 : index
    %c0_9 = arith.constant 0 : index
    %9 = vector.load %arg5[%c0_8, %c0_9] : memref<1x64xf32, #tpu.memory_space<vmem>>, vector<1x64xf32>
    %cst_10 = arith.constant dense<0.000000e+00> : vector<32x64xf32>
    %10 = tpu.matmul %7, %8, %cst_10 {dimension_numbers = #tpu.dot_dimension_numbers<[1], [0], [0], [1], [0, 0, 1, 1], [], []>} : vector<32x32xf32>, vector<32x64xf32>, vector<32x64xf32> -> vector<32x64xf32>
    %11 = vector.broadcast %9 : vector<1x64xf32> to vector<32x64xf32>
    %12 = arith.addf %10, %11 : vector<32x64xf32>
    %cst_11 = arith.constant 0.000000e+00 : f32
    %13 = vector.broadcast %cst_11 : f32 to vector<32x64xf32>
    %14 = arith.maximumf %12, %13 : vector<32x64xf32>
    %c0_12 = arith.constant 0 : index
    %c0_13 = arith.constant 0 : index
    %15 = vector.load %arg6[%c0_12, %c0_13] : memref<64x32xf32, #tpu.memory_space<vmem>>, vector<64x32xf32>
    %c0_14 = arith.constant 0 : index
    %c0_15 = arith.constant 0 : index
    %16 = vector.load %arg7[%c0_14, %c0_15] : memref<1x32xf32, #tpu.memory_space<vmem>>, vector<1x32xf32>
    %cst_16 = arith.constant dense<0.000000e+00> : vector<32x32xf32>
    %17 = tpu.matmul %14, %15, %cst_16 {dimension_numbers = #tpu.dot_dimension_numbers<[1], [0], [0], [1], [0, 0, 1, 1], [], []>} : vector<32x64xf32>, vector<64x32xf32>, vector<32x32xf32> -> vector<32x32xf32>
    %18 = vector.broadcast %16 : vector<1x32xf32> to vector<32x32xf32>
    %19 = arith.addf %17, %18 : vector<32x32xf32>
    %20 = vector.extract_strided_slice %19 {offsets = [0, 0], sizes = [8, 32], strides = [1, 1]} : vector<32x32xf32> to vector<8x32xf32>
    %21 = vector.extract_strided_slice %19 {offsets = [8, 0], sizes = [8, 32], strides = [1, 1]} : vector<32x32xf32> to vector<8x32xf32>
    %22 = vector.extract_strided_slice %19 {offsets = [16, 0], sizes = [8, 32], strides = [1, 1]} : vector<32x32xf32> to vector<8x32xf32>
    %23 = vector.extract_strided_slice %19 {offsets = [24, 0], sizes = [8, 32], strides = [1, 1]} : vector<32x32xf32> to vector<8x32xf32>
    %24 = tpu.concatenate %20, %21, %22, %23 in 1 : vector<8x32xf32>, vector<8x32xf32>, vector<8x32xf32>, vector<8x32xf32> -> vector<8x128xf32>
    %c0_17 = arith.constant 0 : index
    %c0_18 = arith.constant 0 : index
    %25 = vector.load %arg8[%c0_17, %c0_18] : memref<8x128xf32, #tpu.memory_space<vmem>>, vector<8x128xf32>
    tpu.vector_store %arg8[%c0_17, %c0_18], %24 {strides = array<i32>} : memref<8x128xf32, #tpu.memory_space<vmem>>, vector<8x128xf32>,
    return
  }
  func.func @transform_0(%arg0: i32) -> (i32, i32) {
    %c0_i32 = arith.constant 0 : i32
    %c0_i32_0 = arith.constant 0 : i32
    return %arg0, %c0_i32 : i32, i32
  }
  func.func @transform_1(%arg0: i32) -> (i32, i32) {
    %c0_i32 = arith.constant 0 : i32
    %c0_i32_0 = arith.constant 0 : i32
    %c0_i32_1 = arith.constant 0 : i32
    return %c0_i32, %c0_i32_0 : i32, i32
  }
  func.func @transform_2(%arg0: i32) -> (i32, i32) {
    %c0_i32 = arith.constant 0 : i32
    %c0_i32_0 = arith.constant 0 : i32
    %c0_i32_1 = arith.constant 0 : i32
    return %c0_i32, %c0_i32_0 : i32, i32
  }
  func.func @transform_3(%arg0: i32) -> (i32, i32) {
    %c0_i32 = arith.constant 0 : i32
    %c0_i32_0 = arith.constant 0 : i32
    %c0_i32_1 = arith.constant 0 : i32
    return %c0_i32, %c0_i32_0 : i32, i32
  }
  func.func @transform_4(%arg0: i32) -> (i32, i32) {
    %c0_i32 = arith.constant 0 : i32
    %c0_i32_0 = arith.constant 0 : i32
    %c0_i32_1 = arith.constant 0 : i32
    return %c0_i32, %c0_i32_0 : i32, i32
  }
  func.func @transform_5(%arg0: i32) -> (i32, i32) {
    %c0_i32 = arith.constant 0 : i32
    %c0_i32_0 = arith.constant 0 : i32
    %c0_i32_1 = arith.constant 0 : i32
    return %c0_i32, %c0_i32_0 : i32, i32
  }
  func.func @transform_6(%arg0: i32) -> (i32, i32) {
    %c0_i32 = arith.constant 0 : i32
    %c0_i32_0 = arith.constant 0 : i32
    %c0_i32_1 = arith.constant 0 : i32
    return %c0_i32, %c0_i32_0 : i32, i32
  }
  func.func @transform_7(%arg0: i32) -> (i32, i32) {
    %c0_i32 = arith.constant 0 : i32
    %c0_i32_0 = arith.constant 0 : i32
    return %arg0, %c0_i32 : i32, i32
  }
}

</mosaic_0001>

<llo_original>
// kernel: tpu_custom_call.1
$region0: #{tpu_custom_call.1}
  #allocation0 [shape = 'u32[]', space=smem, size = 0x4, offset = 0x4, fixed_abs, tag = 'smem constant byte address 0x4 - core index']
  #allocation1 [shape = 'u32[144,128]{1,0:T(1,128)}', space=vmem, size = 0x12000, scoped, tag = 'internal scratch']
  %s0 = inlined_call_operand.vmem [shape: f32[32,32], index: 0, kind: input, shape index: {}]
  %s1 = inlined_call_operand.vmem [shape: f32[32,32], index: 1, kind: input, shape index: {}]
  %s2 = inlined_call_operand.vmem [shape: f32[1,32], index: 2, kind: input, shape index: {}]
  %s3 = inlined_call_operand.vmem [shape: f32[32,64], index: 3, kind: input, shape index: {}]
  %s4 = inlined_call_operand.vmem [shape: f32[1,64], index: 4, kind: input, shape index: {}]
  %s5 = inlined_call_operand.vmem [shape: f32[64,32], index: 5, kind: input, shape index: {}]
  %s6 = inlined_call_operand.vmem [shape: f32[1,32], index: 6, kind: input, shape index: {}]
  %s7 = inlined_call_operand.hbm [shape: f32[8,128], index: 7, kind: output, shape index: {}]
  %s8 = sld [smem:[#allocation0]]
  $region38: #{tpu_custom_call.1} parent=0
    _
  %s10 = ssub.s32 1, %s8
  %s11 = scalar_select 0, %s10, %s8
  $region1: #{tpu_custom_call.1} parent=0
    #allocation2 [shape = 'u8[4096]{0}', space=vmem, size = 0x1000, scoped, tag = 'output window, operand 0, single buffered']
    #allocation3 [shape = 's32[1]{0}', space=sflag, size = 0x4, scoped, tag = 'scoped memory for tpu_custom_call.1']
    %12 = vsyncpa [#allocation3], 0
    // Predicated region
    $region2: #{tpu_custom_call.1} parent=1 // pred_check
      _
    $region3: #{tpu_custom_call.1} parent=1 // pred_check_branch
      %14 = sbr.rel (0) target = $region5
    $region4: #{tpu_custom_call.1} parent=1 // pred_region
      _
    $region5: #{tpu_custom_call.1} parent=1 // pred_fallthru
      _
    // Predicated region
    $region6: #{tpu_custom_call.1} parent=1 // pred_check
      _
    $region7: #{tpu_custom_call.1} parent=1 // pred_check_branch
      %16 = sbr.rel (0) target = $region9
    $region8: #{tpu_custom_call.1} parent=1 // pred_region
      _
    $region9: #{tpu_custom_call.1} parent=1 // pred_fallthru
      _
    // Predicated region
    $region10: #{tpu_custom_call.1} parent=1 // pred_check
      _
    $region11: #{tpu_custom_call.1} parent=1 // pred_check_branch
      %18 = sbr.rel (0) target = $region13
    $region12: #{tpu_custom_call.1} parent=1 // pred_region
      _
    $region13: #{tpu_custom_call.1} parent=1 // pred_fallthru
      _
    // Predicated region
    $region14: #{tpu_custom_call.1} parent=1 // pred_check
      _
    $region15: #{tpu_custom_call.1} parent=1 // pred_check_branch
      %20 = sbr.rel (0) target = $region17
    $region16: #{tpu_custom_call.1} parent=1 // pred_region
      _
    $region17: #{tpu_custom_call.1} parent=1 // pred_fallthru
      _
    // Predicated region
    $region18: #{tpu_custom_call.1} parent=1 // pred_check
      _
    $region19: #{tpu_custom_call.1} parent=1 // pred_check_branch
      %22 = sbr.rel (0) target = $region21
    $region20: #{tpu_custom_call.1} parent=1 // pred_region
      _
    $region21: #{tpu_custom_call.1} parent=1 // pred_fallthru
      _
    // Predicated region
    $region22: #{tpu_custom_call.1} parent=1 // pred_check
      _
    $region23: #{tpu_custom_call.1} parent=1 // pred_check_branch
      %24 = sbr.rel (0) target = $region25
    $region24: #{tpu_custom_call.1} parent=1 // pred_region
      _
    $region25: #{tpu_custom_call.1} parent=1 // pred_fallthru
      _
    // Predicated region
    $region26: #{tpu_custom_call.1} parent=1 // pred_check
      _
    $region27: #{tpu_custom_call.1} parent=1 // pred_check_branch
      %26 = sbr.rel (0) target = $region29
    $region28: #{tpu_custom_call.1} parent=1 // pred_region
      _
    $region29: #{tpu_custom_call.1} parent=1 // pred_fallthru
      _
    %v27 = vld [vmem:[%s0] sm:$0xff]
    %v28 = vld [vmem:[%s0 + $0x8] sm:$0xff]
    %v29 = vld [vmem:[%s0 + $0x10] sm:$0xff]
    %v30 = vld [vmem:[%s0 + $0x18] sm:$0xff]
    %v31 = vld [vmem:[%s1] sm:$0xff]
    %v32 = vld [vmem:[%s1 + $0x8] sm:$0xff]
    %v33 = vld [vmem:[%s1 + $0x10] sm:$0xff]
    %v34 = vld [vmem:[%s1 + $0x18] sm:$0xff]
    %v35 = vld [vmem:[%s2] sm:$0x1]
    %v37 = vlaneseq
    %v38 = vshrl.u32 %v37, 7
    %v39 = vsub.s32 0, %v38
    %v40 = vrot.slane %v35, %v39
    %vm42 = vcmask 261120
    %v44 = vsel %vm42, %v27, 0
    %v47 = vsel %vm42, %v28, 0
    %v50 = vsel %vm42, %v29, 0
    %v53 = vsel %vm42, %v30, 0
    %55 = vmatprep.subr.mxu0 0.0
    %56 = vmatpush1.msra.mxu0 0.0
    %57 = vmatprep.subr.mxu0 0.0
    %58 = vmatpush1.msra.mxu0 0.0
    %59 = vmatprep.subr.mxu0 0.0
    %60 = vmatpush1.msra.mxu0 0.0
    %61 = vmatprep.subr.mxu0 0.0
    %62 = vmatpush1.msra.mxu0 0.0
    %63 = vmatprep.subr.mxu0 0.0
    %64 = vmatpush1.msra.mxu0 0.0
    %65 = vmatprep.subr.mxu0 0.0
    %66 = vmatpush1.msra.mxu0 0.0
    %67 = vmatprep.subr.mxu0 0.0
    %68 = vmatpush1.msra.mxu0 0.0
    %69 = vmatprep.subr.mxu0 0.0
    %70 = vmatpush1.msra.mxu0 0.0
    %71 = vmatprep.subr.mxu0 0.0
    %72 = vmatpush1.msra.mxu0 0.0
    %73 = vmatprep.subr.mxu0 0.0
    %74 = vmatpush1.msra.mxu0 0.0
    %75 = vmatprep.subr.mxu0 0.0
    %76 = vmatpush1.msra.mxu0 0.0
    %77 = vmatprep.subr.mxu0 0.0
    %78 = vmatpush1.msra.mxu0 0.0
    %79 = vmatprep.subr.mxu0 0.0
    %80 = vmatpush1.msra.mxu0 %v34
    %81 = vmatprep.subr.mxu0 0.0
    %82 = vmatpush1.msra.mxu0 %v33
    %83 = vmatprep.subr.mxu0 0.0
    %84 = vmatpush1.msra.mxu0 %v32
    %85 = vmatprep.subr.mxu0 0.0
    %86 = vmatpush1.msra.mxu0 %v31
    %87 = vmatprep.subr.mxu0 0.0
    %88 = vmatpush2.msra.mxu0 0.0
    %89 = vmatprep.subr.mxu0 0.0
    %90 = vmatpush2.msra.mxu0 0.0
    %91 = vmatprep.subr.mxu0 0.0
    %92 = vmatpush2.msra.mxu0 0.0
    %93 = vmatprep.subr.mxu0 0.0
    %94 = vmatpush2.msra.mxu0 0.0
    %95 = vmatprep.subr.mxu0 0.0
    %96 = vmatpush2.msra.mxu0 0.0
    %97 = vmatprep.subr.mxu0 0.0
    %98 = vmatpush2.msra.mxu0 0.0
    %99 = vmatprep.subr.mxu0 0.0
    %100 = vmatpush2.msra.mxu0 0.0
    %101 = vmatprep.subr.mxu0 0.0
    %102 = vmatpush2.msra.mxu0 0.0
    %103 = vmatprep.subr.mxu0 0.0
    %104 = vmatpush2.msra.mxu0 0.0
    %105 = vmatprep.subr.mxu0 0.0
    %106 = vmatpush2.msra.mxu0 0.0
    %107 = vmatprep.subr.mxu0 0.0
    %108 = vmatpush2.msra.mxu0 0.0
    %109 = vmatprep.subr.mxu0 0.0
    %110 = vmatpush2.msra.mxu0 0.0
    %111 = vmatprep.subr.mxu0 0.0
    %112 = vmatpush2.msra.mxu0 0.0
    %113 = vmatprep.subr.mxu0 0.0
    %114 = vmatpush2.msra.mxu0 0.0
    %115 = vmatprep.subr.mxu0 0.0
    %116 = vmatpush2.msra.mxu0 0.0
    %117 = vmatprep.subr.mxu0 0.0
    %118 = vmatpush2.msra.mxu0 0.0
    %119 = vmatprep.mubr.f32.mxu0 0.0
    %120 = vmatmul.mubr.f32.gmra.mxu0 %v44
    %v121 = vpop.f32.mrf.mxu0
    %v122 = vadd.f32 %v40, %v121
    %v123 = vpop.f32.mrf.mxu0
    %124 = vmatprep.mubr.f32.mxu0 0.0
    %125 = vmatmul.mubr.f32.gmra.mxu0 %v47
    %v126 = vpop.f32.mrf.mxu0
    %v127 = vadd.f32 %v40, %v126
    %v128 = vpop.f32.mrf.mxu0
    %129 = vmatprep.mubr.f32.mxu0 0.0
    %130 = vmatmul.mubr.f32.gmra.mxu0 %v50
    %v131 = vpop.f32.mrf.mxu0
    %v132 = vadd.f32 %v40, %v131
    %v133 = vpop.f32.mrf.mxu0
    %134 = vmatprep.mubr.f32.mxu0 0.0
    %135 = vmatmul.mubr.f32.gmra.mxu0 %v53
    %v136 = vpop.f32.mrf.mxu0
    %v137 = vadd.f32 %v40, %v136
    %v138 = vpop.f32.mrf.mxu0
    %139 = vdwg.mxu0
    %v140 = vmax.f32 %v122, 0.0
    %v141 = vmax.f32 %v127, 0.0
    %v142 = vmax.f32 %v132, 0.0
    %v143 = vmax.f32 %v137, 0.0
    %v144 = vld [vmem:[%s3] sm:$0xff]
    %v145 = vld [vmem:[%s3 + $0x8] sm:$0xff]
    %v146 = vld [vmem:[%s3 + $0x10] sm:$0xff]
    %v147 = vld [vmem:[%s3 + $0x18] sm:$0xff]
    %v148 = vld [vmem:[%s4] sm:$0x1]
    %v150 = vlaneseq
    %v151 = vshrl.u32 %v150, 7
    %v152 = vsub.s32 0, %v151
    %v153 = vrot.slane %v148, %v152
    %v156 = vsel %vm42, %v140, 0
    %v159 = vsel %vm42, %v141, 0
    %v162 = vsel %vm42, %v142, 0
    %v165 = vsel %vm42, %v143, 0
    %167 = vmatprep.subr.mxu0 0.0
    %168 = vmatpush1.msra.mxu0 0.0
    %169 = vmatprep.subr.mxu0 0.0
    %170 = vmatpush1.msra.mxu0 0.0
    %171 = vmatprep.subr.mxu0 0.0
    %172 = vmatpush1.msra.mxu0 0.0
    %173 = vmatprep.subr.mxu0 0.0
    %174 = vmatpush1.msra.mxu0 0.0
    %175 = vmatprep.subr.mxu0 0.0
    %176 = vmatpush1.msra.mxu0 0.0
    %177 = vmatprep.subr.mxu0 0.0
    %178 = vmatpush1.msra.mxu0 0.0
    %179 = vmatprep.subr.mxu0 0.0
    %180 = vmatpush1.msra.mxu0 0.0
    %181 = vmatprep.subr.mxu0 0.0
    %182 = vmatpush1.msra.mxu0 0.0
    %183 = vmatprep.subr.mxu0 0.0
    %184 = vmatpush1.msra.mxu0 0.0
    %185 = vmatprep.subr.mxu0 0.0
    %186 = vmatpush1.msra.mxu0 0.0
    %187 = vmatprep.subr.mxu0 0.0
    %188 = vmatpush1.msra.mxu0 0.0
    %189 = vmatprep.subr.mxu0 0.0
    %190 = vmatpush1.msra.mxu0 0.0
    %191 = vmatprep.subr.mxu0 0.0
    %192 = vmatpush1.msra.mxu0 %v147
    %193 = vmatprep.subr.mxu0 0.0
    %194 = vmatpush1.msra.mxu0 %v146
    %195 = vmatprep.subr.mxu0 0.0
    %196 = vmatpush1.msra.mxu0 %v145
    %197 = vmatprep.subr.mxu0 0.0
    %198 = vmatpush1.msra.mxu0 %v144
    %199 = vmatprep.subr.mxu0 0.0
    %200 = vmatpush2.msra.mxu0 0.0
    %201 = vmatprep.subr.mxu0 0.0
    %202 = vmatpush2.msra.mxu0 0.0
    %203 = vmatprep.subr.mxu0 0.0
    %204 = vmatpush2.msra.mxu0 0.0
    %205 = vmatprep.subr.mxu0 0.0
    %206 = vmatpush2.msra.mxu0 0.0
    %207 = vmatprep.subr.mxu0 0.0
    %208 = vmatpush2.msra.mxu0 0.0
    %209 = vmatprep.subr.mxu0 0.0
    %210 = vmatpush2.msra.mxu0 0.0
    %211 = vmatprep.subr.mxu0 0.0
    %212 = vmatpush2.msra.mxu0 0.0
    %213 = vmatprep.subr.mxu0 0.0
    %214 = vmatpush2.msra.mxu0 0.0
    %215 = vmatprep.subr.mxu0 0.0
    %216 = vmatpush2.msra.mxu0 0.0
    %217 = vmatprep.subr.mxu0 0.0
    %218 = vmatpush2.msra.mxu0 0.0
    %219 = vmatprep.subr.mxu0 0.0
    %220 = vmatpush2.msra.mxu0 0.0
    %221 = vmatprep.subr.mxu0 0.0
    %222 = vmatpush2.msra.mxu0 0.0
    %223 = vmatprep.subr.mxu0 0.0
    %224 = vmatpush2.msra.mxu0 0.0
    %225 = vmatprep.subr.mxu0 0.0
    %226 = vmatpush2.msra.mxu0 0.0
    %227 = vmatprep.subr.mxu0 0.0
    %228 = vmatpush2.msra.mxu0 0.0
    %229 = vmatprep.subr.mxu0 0.0
    %230 = vmatpush2.msra.mxu0 0.0
    %231 = vmatprep.mubr.f32.mxu0 0.0
    %232 = vmatmul.mubr.f32.gmra.mxu0 %v156
    %v233 = vpop.f32.mrf.mxu0
    %v234 = vadd.f32 %v153, %v233
    %v235 = vpop.f32.mrf.mxu0
    %236 = vmatprep.mubr.f32.mxu0 0.0
    %237 = vmatmul.mubr.f32.gmra.mxu0 %v159
    %v238 = vpop.f32.mrf.mxu0
    %v239 = vadd.f32 %v153, %v238
    %v240 = vpop.f32.mrf.mxu0
    %241 = vmatprep.mubr.f32.mxu0 0.0
    %242 = vmatmul.mubr.f32.gmra.mxu0 %v162
    %v243 = vpop.f32.mrf.mxu0
    %v244 = vadd.f32 %v153, %v243
    %v245 = vpop.f32.mrf.mxu0
    %246 = vmatprep.mubr.f32.mxu0 0.0
    %247 = vmatmul.mubr.f32.gmra.mxu0 %v165
    %v248 = vpop.f32.mrf.mxu0
    %v249 = vadd.f32 %v153, %v248
    %v250 = vpop.f32.mrf.mxu0
    %251 = vdwg.mxu0
    %v252 = vmax.f32 %v234, 0.0
    %v253 = vmax.f32 %v239, 0.0
    %v254 = vmax.f32 %v244, 0.0
    %v255 = vmax.f32 %v249, 0.0
    %v256 = vld [vmem:[%s5] sm:$0xff]
    %v257 = vld [vmem:[%s5 + $0x8] sm:$0xff]
    %v258 = vld [vmem:[%s5 + $0x10] sm:$0xff]
    %v259 = vld [vmem:[%s5 + $0x18] sm:$0xff]
    %v260 = vld [vmem:[%s5 + $0x20] sm:$0xff]
    %v261 = vld [vmem:[%s5 + $0x28] sm:$0xff]
    %v262 = vld [vmem:[%s5 + $0x30] sm:$0xff]
    %v263 = vld [vmem:[%s5 + $0x38] sm:$0xff]
    %v264 = vld [vmem:[%s6] sm:$0x1]
    %v266 = vlaneseq
    %v267 = vshrl.u32 %v266, 7
    %v268 = vsub.s32 0, %v267
    %v269 = vrot.slane %v264, %v268
    %vm271 = vcmask 523264
    %v273 = vsel %vm271, %v252, 0
    %v276 = vsel %vm271, %v253, 0
    %v279 = vsel %vm271, %v254, 0
    %v282 = vsel %vm271, %v255, 0
    %284 = vmatprep.subr.mxu0 0.0
    %285 = vmatpush1.msra.mxu0 0.0
    %286 = vmatprep.subr.mxu0 0.0
    %287 = vmatpush1.msra.mxu0 0.0
    %288 = vmatprep.subr.mxu0 0.0
    %289 = vmatpush1.msra.mxu0 0.0
    %290 = vmatprep.subr.mxu0 0.0
    %291 = vmatpush1.msra.mxu0 0.0
    %292 = vmatprep.subr.mxu0 0.0
    %293 = vmatpush1.msra.mxu0 0.0
    %294 = vmatprep.subr.mxu0 0.0
    %295 = vmatpush1.msra.mxu0 0.0
    %296 = vmatprep.subr.mxu0 0.0
    %297 = vmatpush1.msra.mxu0 0.0
    %298 = vmatprep.subr.mxu0 0.0
    %299 = vmatpush1.msra.mxu0 0.0
    %300 = vmatprep.subr.mxu0 0.0
    %301 = vmatpush1.msra.mxu0 %v263
    %302 = vmatprep.subr.mxu0 0.0
    %303 = vmatpush1.msra.mxu0 %v262
    %304 = vmatprep.subr.mxu0 0.0
    %305 = vmatpush1.msra.mxu0 %v261
    %306 = vmatprep.subr.mxu0 0.0
    %307 = vmatpush1.msra.mxu0 %v260
    %308 = vmatprep.subr.mxu0 0.0
    %309 = vmatpush1.msra.mxu0 %v259
    %310 = vmatprep.subr.mxu0 0.0
    %311 = vmatpush1.msra.mxu0 %v258
    %312 = vmatprep.subr.mxu0 0.0
    %313 = vmatpush1.msra.mxu0 %v257
    %314 = vmatprep.subr.mxu0 0.0
    %315 = vmatpush1.msra.mxu0 %v256
    %316 = vmatprep.subr.mxu0 0.0
    %317 = vmatpush2.msra.mxu0 0.0
    %318 = vmatprep.subr.mxu0 0.0
    %319 = vmatpush2.msra.mxu0 0.0
    %320 = vmatprep.subr.mxu0 0.0
    %321 = vmatpush2.msra.mxu0 0.0
    %322 = vmatprep.subr.mxu0 0.0
    %323 = vmatpush2.msra.mxu0 0.0
    %324 = vmatprep.subr.mxu0 0.0
    %325 = vmatpush2.msra.mxu0 0.0
    %326 = vmatprep.subr.mxu0 0.0
    %327 = vmatpush2.msra.mxu0 0.0
    %328 = vmatprep.subr.mxu0 0.0
    %329 = vmatpush2.msra.mxu0 0.0
    %330 = vmatprep.subr.mxu0 0.0
    %331 = vmatpush2.msra.mxu0 0.0
    %332 = vmatprep.subr.mxu0 0.0
    %333 = vmatpush2.msra.mxu0 0.0
    %334 = vmatprep.subr.mxu0 0.0
    %335 = vmatpush2.msra.mxu0 0.0
    %336 = vmatprep.subr.mxu0 0.0
    %337 = vmatpush2.msra.mxu0 0.0
    %338 = vmatprep.subr.mxu0 0.0
    %339 = vmatpush2.msra.mxu0 0.0
    %340 = vmatprep.subr.mxu0 0.0
    %341 = vmatpush2.msra.mxu0 0.0
    %342 = vmatprep.subr.mxu0 0.0
    %343 = vmatpush2.msra.mxu0 0.0
    %344 = vmatprep.subr.mxu0 0.0
    %345 = vmatpush2.msra.mxu0 0.0
    %346 = vmatprep.subr.mxu0 0.0
    %347 = vmatpush2.msra.mxu0 0.0
    %348 = vmatprep.mubr.f32.mxu0 0.0
    %349 = vmatmul.mubr.f32.gmra.mxu0 %v273
    %v350 = vpop.f32.mrf.mxu0
    %v351 = vadd.f32 %v269, %v350
    %v352 = vpop.f32.mrf.mxu0
    %353 = vmatprep.mubr.f32.mxu0 0.0
    %354 = vmatmul.mubr.f32.gmra.mxu0 %v276
    %v355 = vpop.f32.mrf.mxu0
    %v356 = vadd.f32 %v269, %v355
    %v357 = vpop.f32.mrf.mxu0
    %358 = vmatprep.mubr.f32.mxu0 0.0
    %359 = vmatmul.mubr.f32.gmra.mxu0 %v279
    %v360 = vpop.f32.mrf.mxu0
    %v361 = vadd.f32 %v269, %v360
    %v362 = vpop.f32.mrf.mxu0
    %363 = vmatprep.mubr.f32.mxu0 0.0
    %364 = vmatmul.mubr.f32.gmra.mxu0 %v282
    %v365 = vpop.f32.mrf.mxu0
    %v366 = vadd.f32 %v269, %v365
    %v367 = vpop.f32.mrf.mxu0
    %368 = vdwg.mxu0
    %370 = vrot.lane.b32.xlu0 %v356, 32
    %v371 = vpop.permute.xlu0 %370
    %374 = vrot.lane.b32.xlu0 %v361, 64
    %v375 = vpop.permute.xlu0 %374
    %378 = vrot.lane.b32.xlu0 %v366, 96
    %v379 = vpop.permute.xlu0 %378
    %v381 = vsel %vm42, %v351, %v371
    %v382 = vsel %vm271, %v381, %v375
    %vm383 = vcmask 785408
    %v384 = vsel %vm383, %v382, %v379
    %385 = vst [vmem:[#allocation2] sm:$0xff] %v384
    // Predicated region
    $region30: #{tpu_custom_call.1} parent=1 // pred_check
      _
    $region31: #{tpu_custom_call.1} parent=1 // pred_check_branch
      %387 = sbr.rel (0) target = $region33
    $region32: #{tpu_custom_call.1} parent=1 // pred_region
      %s389 = ssub.s32 128, 128
      %390 = vsyncadd [#allocation3], %s389
      %s392 = sshll.u32 [#allocation2], 4
      %s393 = int_to_ptr.vmem [resolvable:$true] %s392
      %395 = dma.vmem_to_hbm [thread:$0]  %s393, 128, %s7, [#allocation3]
    $region33: #{tpu_custom_call.1} parent=1 // pred_fallthru
      _
    // Predicated region
    $region34: #{tpu_custom_call.1} parent=1 // pred_check
      _
    $region35: #{tpu_custom_call.1} parent=1 // pred_check_branch
      %397 = sbr.rel (0) target = $region37
    $region36: #{tpu_custom_call.1} parent=1 // pred_region
      %398 = dma.done [#allocation3], 128
    $region37: #{tpu_custom_call.1} parent=1 // pred_fallthru
      _
    %399 = vsyncpa [#allocation3], 1

</llo_original>
